<compile_context>
chip_gen: v5e
topology: v5e:2x2
jax: 0.10.0
libtpu: 0.0.40
codegen_flags: <defaults>
</compile_context>

<pallas_src>
import functools

import numpy as np
import jax
import jax.numpy as jnp
from jax.experimental import pallas as pl
from jax.experimental.pallas import tpu as pltpu

OUT_H, OUT_W = 32, 32


# ---------------------------------------------------------------------------
# Bilinear interpolation matrices.
# F.interpolate(mode='bilinear', align_corners=False) is linear, so it is
# exactly  Ry @ cam @ Rx^T  with these 1-D interpolation matrices.
# ---------------------------------------------------------------------------
@functools.lru_cache(maxsize=None)
def _bilinear_matrix(out_size: int, in_size: int) -> np.ndarray:
    dst = np.arange(out_size, dtype=np.float64)
    scale = in_size / out_size
    src = (dst + 0.5) * scale - 0.5
    src = np.maximum(src, 0.0)                         # torch clamps negative source coords
    i0 = np.minimum(np.floor(src).astype(np.int64), in_size - 1)
    i1 = np.minimum(i0 + 1, in_size - 1)
    lam = src - i0
    R = np.zeros((out_size, in_size), dtype=np.float32)
    rows = np.arange(out_size)
    np.add.at(R, (rows, i0), 1.0 - lam)
    np.add.at(R, (rows, i1), lam)
    return R


# ---------------------------------------------------------------------------
# Kernel 1: memory-bound channel-block reduction (native (C, H, W) layout).
#   cam = sum_c mean_hw(grad_c) * act_c   accumulated in the resident f32
#   output block (same output block index across the "arbitrary" channel axis).
# ---------------------------------------------------------------------------
def _cam_reduce_kernel(act_ref, grad_ref, cam_ref):
    c = pl.program_id(1)

    @pl.when(c == 0)
    def _init():
        cam_ref[...] = jnp.zeros_like(cam_ref)

    act = act_ref[...].astype(jnp.float32)             # (c_blk, H, W)
    grad = grad_ref[...].astype(jnp.float32)           # (c_blk, H, W)
    _, h, w = grad.shape

    # per-channel spatial mean of the gradient (a_k), staged single-axis reduces
    col_sum = jnp.sum(grad, axis=1, keepdims=True)     # (c_blk, 1, W) sublane reduce
    a_k = jnp.sum(col_sum, axis=2, keepdims=True) * (1.0 / (h * w))   # (c_blk, 1, 1)

    # partial cam for this channel block; channel reduce is pure vreg adds
    cam_ref[...] += jnp.sum(a_k * act, axis=0, keepdims=True)         # (1, H, W)


# ---------------------------------------------------------------------------
# Kernel 2: tiny finalize -- fold parallel slabs, pre-ReLU max, ReLU,
# separable bilinear resize to 32x32 (two small MXU matmuls), normalize.
# ---------------------------------------------------------------------------
def _resize_kernel(cam_ref, ry_ref, rxt_ref, out_ref):
    cam = jnp.sum(cam_ref[...], axis=0)                # (H, W): fold parallel slabs
    cam_max = jnp.max(cam, keepdims=True)              # (1, 1) pre-ReLU max (torch semantics)
    cam_relu = jnp.maximum(cam, 0.0)
    tmp = jnp.dot(ry_ref[...], cam_relu, preferred_element_type=jnp.float32)   # (32, W)
    out = jnp.dot(tmp, rxt_ref[...], preferred_element_type=jnp.float32)       # (32, 32)
    # 1/max commutes through the linear resize; 0/0 -> NaN exactly as in torch.
    out_ref[...] = out / cam_max


# ---------------------------------------------------------------------------
# Tiling helpers.
# ---------------------------------------------------------------------------
def _round_up(x: int, m: int) -> int:
    return -(-x // m) * m


def _vmem_limit_bytes() -> int:
    """Explicit scoped-VMEM limit, sized per generation with headroom
    (~96 MiB on v5e/v6e's 128 MiB VMEM, ~48 MiB on v7x's 64 MiB)."""
    try:
        phys = int(pltpu.get_tpu_info().vmem_capacity_bytes)
    except Exception:
        phys = 64 * 1024 * 1024                        # conservative (v7x)
    return max(32 * 1024 * 1024, min(phys - 16 * 1024 * 1024, 96 * 1024 * 1024))


def _pick_c_block(C: int, H: int, W: int, itemsize: int, vmem_limit: int) -> int:
    """Largest channel block that (a) divides C (no pad pass, no OOB blocks)
    and (b) keeps ALL residents -- double-buffered act+grad blocks, f32 cast
    temporaries, and the resident f32 cam block -- inside the VMEM budget.
    Prefers sublane-aligned divisors (8 for f32, 16 for bf16)."""
    sub = 16 if itemsize < 4 else 8
    wp = _round_up(W, 128)
    in_bytes = _round_up(H, sub) * wp * itemsize       # one channel, one input, one buffer
    f32_bytes = _round_up(H, 8) * wp * 4               # f32 cast temporary per channel
    per_chan = 2 * 2 * in_bytes + 2 * f32_bytes        # act+grad double-buffered + casts
    fixed = 2 * _round_up(H, 8) * wp * 4 + (2 << 20)   # resident cam block + slack
    cap = max(1, (vmem_limit - fixed) // per_chan)
    cap = int(min(cap, C))
    best_any = None
    for b in range(cap, 0, -1):
        if C % b == 0:
            if b == C or b % sub == 0:
                return b
            if best_any is None:
                best_any = b
    return best_any if best_any is not None else 1


# ---------------------------------------------------------------------------
# Wrapper: one (32, 32) Grad-CAM mask from a (C, H, W) activation + gradient.
# ---------------------------------------------------------------------------
@jax.jit
def gradcam_mask(activation: jax.Array, gradient: jax.Array) -> jax.Array:
    C, H, W = activation.shape
    itemsize = np.dtype(activation.dtype).itemsize
    vmem_limit = _vmem_limit_bytes()

    c_blk = _pick_c_block(C, H, W, itemsize, vmem_limit)
    n_blocks = C // c_blk
    if n_blocks == 1 and C % 2 == 0 and C >= 16:
        c_blk = C // 2                                 # give v7x's 2nd TensorCore a slab
        n_blocks = 2
    n_par = 2 if n_blocks % 2 == 0 else 1              # parallel slabs (both TCs on v7x)
    n_c = n_blocks // n_par

    # --- kernel 1: channel-block reduction over the native layout (no relayout, no pad) ---
    cam_partial = pl.pallas_call(
        _cam_reduce_kernel,
        out_shape=jax.ShapeDtypeStruct((n_par, H, W), jnp.float32),
        grid_spec=pltpu.PrefetchScalarGridSpec(
            num_scalar_prefetch=0,
            grid=(n_par, n_c),
            in_specs=[
                pl.BlockSpec((c_blk, H, W), lambda p, c: (p * n_c + c, 0, 0)),
                pl.BlockSpec((c_blk, H, W), lambda p, c: (p * n_c + c, 0, 0)),
            ],
            out_specs=pl.BlockSpec((1, H, W), lambda p, c: (p, 0, 0)),
        ),
        compiler_params=pltpu.CompilerParams(
            dimension_semantics=("parallel", "arbitrary"),
            vmem_limit_bytes=int(vmem_limit),
        ),
    )(activation, gradient)

    # --- kernel 2: fold slabs, pre-ReLU max, ReLU, separable 32x32 resize, normalize ---
    ry = jnp.asarray(_bilinear_matrix(OUT_H, H))       # (32, H) compile-time constant
    rx_t = jnp.asarray(_bilinear_matrix(OUT_W, W).T)   # (W, 32) compile-time constant
    mask = pl.pallas_call(
        _resize_kernel,
        out_shape=jax.ShapeDtypeStruct((OUT_H, OUT_W), jnp.float32),
        grid_spec=pltpu.PrefetchScalarGridSpec(
            num_scalar_prefetch=0,
            grid=(1,),
            in_specs=[
                pl.BlockSpec((n_par, H, W), lambda i: (0, 0, 0)),
                pl.BlockSpec((OUT_H, H), lambda i: (0, 0)),
                pl.BlockSpec((W, OUT_W), lambda i: (0, 0)),
            ],
            out_specs=pl.BlockSpec((OUT_H, OUT_W), lambda i: (0, 0)),
        ),
        compiler_params=pltpu.CompilerParams(
            dimension_semantics=("arbitrary",)),
    )(cam_partial, ry, rx_t)

    return mask


def _ref_mask(act, grad):
    """Pure-JAX reference of the same math (original torch ordering)."""
    a_k = jnp.mean(grad, axis=(1, 2), keepdims=True)
    cam = jnp.sum(a_k * act, axis=0)
    cam_n = jnp.maximum(cam, 0.0) / jnp.max(cam)
    ry = jnp.asarray(_bilinear_matrix(OUT_H, act.shape[1]))
    rx = jnp.asarray(_bilinear_matrix(OUT_W, act.shape[2]))
    return ry @ cam_n @ rx.T


if __name__ == "__main__":
    # TODO(synk): the wrapped model's forward pass, autograd backward
    # (outs[target].backward) and hook registration/removal have no generic
    # Pallas equivalent; deterministic synthetic (activation, gradient) pairs
    # stand in for the hook results, and only the per-layer Grad-CAM mask
    # computation (the hot path of GradCam.forward) is kernelized.
    key = jax.random.PRNGKey(0)
    layer_shapes = [(4, 8, 8), (4, 16, 16)]            # two hooked conv layers (C, H, W)
    keys = jax.random.split(key, 2 * len(layer_shapes))

    forward_result_list = []
    grads_per_layer = []
    for i, shp in enumerate(layer_shapes):
        forward_result_list.append(jax.random.normal(keys[2 * i], shp, dtype=jnp.float32))
        grads_per_layer.append(jax.random.normal(keys[2 * i + 1], shp, dtype=jnp.float32))
    # backward hooks fire in reverse layer order, exactly as in the torch module
    backward_result_list = list(reversed(grads_per_layer))

    # dispatch all layers, then block once (no per-layer sync in the hot loop)
    mask_list = []
    for i, forward_result in enumerate(forward_result_list):
        backward_result = backward_result_list[-i - 1]
        mask_list.append(gradcam_mask(forward_result, backward_result))
    mask_list = jax.block_until_ready(mask_list)

    for i, forward_result in enumerate(forward_result_list):
        backward_result = backward_result_list[-i - 1]
        ref = _ref_mask(forward_result, backward_result)
        np.testing.assert_allclose(np.asarray(mask_list[i]), np.asarray(ref),
                                   rtol=1e-4, atol=1e-5)
        assert mask_list[i].shape == (OUT_H, OUT_W)

    print("KERNEL_OK")
</pallas_src>

<mosaic_0001>
module attributes {stable_mosaic.version = 11 : i64} {
  func.func @_resize_kernel(%arg0: i32, %arg1: memref<1x8x8xf32, #tpu.memory_space<vmem>>, %arg2: memref<32x8xf32, #tpu.memory_space<vmem>>, %arg3: memref<8x32xf32, #tpu.memory_space<vmem>>, %arg4: memref<32x32xf32, #tpu.memory_space<vmem>>) attributes {dimension_semantics = [#tpu.dimension_semantics<arbitrary>], iteration_bounds = array<i64: 1>, scalar_prefetch = 0 : i64, scratch_operands = 0 : i64, tpu.core_type = #tpu.core_type<tc>, window_params = [{pipeline_mode = #tpu.pipeline_mode<synchronous>, transform_indices = @transform_0, window_bounds = array<i64: 1, 8, 8>}, {pipeline_mode = #tpu.pipeline_mode<synchronous>, transform_indices = @transform_1, window_bounds = array<i64: 32, 8>}, {pipeline_mode = #tpu.pipeline_mode<synchronous>, transform_indices = @transform_2, window_bounds = array<i64: 8, 32>}, {pipeline_mode = #tpu.pipeline_mode<synchronous>, transform_indices = @transform_3, window_bounds = array<i64: 32, 32>}]} {
    %c0 = arith.constant 0 : index
    %c0_0 = arith.constant 0 : index
    %c0_1 = arith.constant 0 : index
    %0 = vector.load %arg1[%c0, %c0_0, %c0_1] : memref<1x8x8xf32, #tpu.memory_space<vmem>>, vector<1x8x8xf32>
    %cst = arith.constant dense<0.000000e+00> : vector<8x8xf32>
    %1 = vector.multi_reduction <add>, %0, %cst [0] : vector<1x8x8xf32> to vector<8x8xf32>
    %2 = vector.shape_cast %1 : vector<8x8xf32> to vector<1x8x8xf32>
    %cst_2 = arith.constant dense<0xFF800000> : vector<1xf32>
    %3 = vector.multi_reduction <maximumf>, %2, %cst_2 [1, 2] : vector<1x8x8xf32> to vector<1xf32>
    %4 = vector.shape_cast %3 : vector<1xf32> to vector<1x1x1xf32>
    %5 = vector.extract %4[0, 0, 0] : f32 from vector<1x1x1xf32>
    %6 = vector.broadcast %5 : f32 to vector<1x1xf32>
    %cst_3 = arith.constant 0.000000e+00 : f32
    %7 = vector.broadcast %cst_3 : f32 to vector<8x8xf32>
    %8 = arith.maximumf %1, %7 : vector<8x8xf32>
    %c0_4 = arith.constant 0 : index
    %c0_5 = arith.constant 0 : index
    %9 = vector.load %arg2[%c0_4, %c0_5] : memref<32x8xf32, #tpu.memory_space<vmem>>, vector<32x8xf32>
    %cst_6 = arith.constant dense<0.000000e+00> : vector<32x8xf32>
    %10 = tpu.matmul %9, %8, %cst_6 {dimension_numbers = #tpu.dot_dimension_numbers<[1], [0], [0], [1], [0, 0, 1, 1], [], []>} : vector<32x8xf32>, vector<8x8xf32>, vector<32x8xf32> -> vector<32x8xf32>
    %c0_7 = arith.constant 0 : index
    %c0_8 = arith.constant 0 : index
    %11 = vector.load %arg3[%c0_7, %c0_8] : memref<8x32xf32, #tpu.memory_space<vmem>>, vector<8x32xf32>
    %cst_9 = arith.constant dense<0.000000e+00> : vector<32x32xf32>
    %12 = tpu.matmul %10, %11, %cst_9 {dimension_numbers = #tpu.dot_dimension_numbers<[1], [0], [0], [1], [0, 0, 1, 1], [], []>} : vector<32x8xf32>, vector<8x32xf32>, vector<32x32xf32> -> vector<32x32xf32>
    %13 = vector.broadcast %6 : vector<1x1xf32> to vector<32x32xf32>
    %14 = arith.divf %12, %13 : vector<32x32xf32>
    %c0_10 = arith.constant 0 : index
    %c0_11 = arith.constant 0 : index
    %15 = vector.load %arg4[%c0_10, %c0_11] : memref<32x32xf32, #tpu.memory_space<vmem>>, vector<32x32xf32>
    tpu.vector_store %arg4[%c0_10, %c0_11], %14 {strides = array<i32>} : memref<32x32xf32, #tpu.memory_space<vmem>>, vector<32x32xf32>,
    return
  }
  func.func @transform_0(%arg0: i32) -> (i32, i32, i32) {
    %c0_i32 = arith.constant 0 : i32
    %c0_i32_0 = arith.constant 0 : i32
    %c0_i32_1 = arith.constant 0 : i32
    %c0_i32_2 = arith.constant 0 : i32
    return %c0_i32, %c0_i32_0, %c0_i32_1 : i32, i32, i32
  }
  func.func @transform_1(%arg0: i32) -> (i32, i32) {
    %c0_i32 = arith.constant 0 : i32
    %c0_i32_0 = arith.constant 0 : i32
    %c0_i32_1 = arith.constant 0 : i32
    return %c0_i32, %c0_i32_0 : i32, i32
  }
  func.func @transform_2(%arg0: i32) -> (i32, i32) {
    %c0_i32 = arith.constant 0 : i32
    %c0_i32_0 = arith.constant 0 : i32
    %c0_i32_1 = arith.constant 0 : i32
    return %c0_i32, %c0_i32_0 : i32, i32
  }
  func.func @transform_3(%arg0: i32) -> (i32, i32) {
    %c0_i32 = arith.constant 0 : i32
    %c0_i32_0 = arith.constant 0 : i32
    %c0_i32_1 = arith.constant 0 : i32
    return %c0_i32, %c0_i32_0 : i32, i32
  }
}

module attributes {stable_mosaic.version = 11 : i64} {
  func.func @_cam_reduce_kernel(%arg0: i32, %arg1: i32, %arg2: memref<4x8x8xf32, #tpu.memory_space<vmem>>, %arg3: memref<4x8x8xf32, #tpu.memory_space<vmem>>, %arg4: memref<1x8x8xf32, #tpu.memory_space<vmem>>) attributes {dimension_semantics = [#tpu.dimension_semantics<parallel>, #tpu.dimension_semantics<arbitrary>], iteration_bounds = array<i64: 1, 1>, scalar_prefetch = 0 : i64, scratch_operands = 0 : i64, tpu.core_type = #tpu.core_type<tc>, window_params = [{transform_indices = @transform_0, window_bounds = array<i64: 4, 8, 8>}, {transform_indices = @transform_1, window_bounds = array<i64: 4, 8, 8>}, {transform_indices = @transform_2, window_bounds = array<i64: 1, 8, 8>}]} {
    %c0_i32 = arith.constant 0 : i32
    %0 = arith.cmpi eq, %arg1, %c0_i32 : i32
    %1 = arith.extui %0 : i1 to i32
    %c0_i32_0 = arith.constant 0 : i32
    %2 = arith.cmpi ne, %1, %c0_i32_0 : i32
    scf.if %2 {
      %cst_15 = arith.constant 0.000000e+00 : f32
      %18 = vector.broadcast %cst_15 : f32 to vector<1x8x8xf32>
      %c0_16 = arith.constant 0 : index
      %c0_17 = arith.constant 0 : index
      %c0_18 = arith.constant 0 : index
      %19 = vector.load %arg4[%c0_16, %c0_17, %c0_18] : memref<1x8x8xf32, #tpu.memory_space<vmem>>, vector<1x8x8xf32>
      tpu.vector_store %arg4[%c0_16, %c0_17, %c0_18], %18 {strides = array<i32>} : memref<1x8x8xf32, #tpu.memory_space<vmem>>, vector<1x8x8xf32>,
    } else {
    }
    %c0 = arith.constant 0 : index
    %c0_1 = arith.constant 0 : index
    %c0_2 = arith.constant 0 : index
    %3 = vector.load %arg2[%c0, %c0_1, %c0_2] : memref<4x8x8xf32, #tpu.memory_space<vmem>>, vector<4x8x8xf32>
    %c0_3 = arith.constant 0 : index
    %c0_4 = arith.constant 0 : index
    %c0_5 = arith.constant 0 : index
    %4 = vector.load %arg3[%c0_3, %c0_4, %c0_5] : memref<4x8x8xf32, #tpu.memory_space<vmem>>, vector<4x8x8xf32>
    %cst = arith.constant dense<0.000000e+00> : vector<4x8xf32>
    %5 = vector.multi_reduction <add>, %4, %cst [1] : vector<4x8x8xf32> to vector<4x8xf32>
    %6 = vector.shape_cast %5 : vector<4x8xf32> to vector<4x1x8xf32>
    %cst_6 = arith.constant dense<0.000000e+00> : vector<4x1xf32>
    %7 = vector.multi_reduction <add>, %6, %cst_6 [2] : vector<4x1x8xf32> to vector<4x1xf32>
    %8 = vector.shape_cast %7 : vector<4x1xf32> to vector<4x1x1xf32>
    %cst_7 = arith.constant 1.562500e-02 : f32
    %9 = vector.broadcast %cst_7 : f32 to vector<4x1x1xf32>
    %10 = arith.mulf %8, %9 : vector<4x1x1xf32>
    %c0_8 = arith.constant 0 : index
    %c0_9 = arith.constant 0 : index
    %c0_10 = arith.constant 0 : index
    %11 = vector.load %arg4[%c0_8, %c0_9, %c0_10] : memref<1x8x8xf32, #tpu.memory_space<vmem>>, vector<1x8x8xf32>
    %12 = vector.broadcast %10 : vector<4x1x1xf32> to vector<4x8x8xf32>
    %13 = arith.mulf %12, %3 : vector<4x8x8xf32>
    %cst_11 = arith.constant dense<0.000000e+00> : vector<8x8xf32>
    %14 = vector.multi_reduction <add>, %13, %cst_11 [0] : vector<4x8x8xf32> to vector<8x8xf32>
    %15 = vector.shape_cast %14 : vector<8x8xf32> to vector<1x8x8xf32>
    %16 = arith.addf %11, %15 : vector<1x8x8xf32>
    %c0_12 = arith.constant 0 : index
    %c0_13 = arith.constant 0 : index
    %c0_14 = arith.constant 0 : index
    %17 = vector.load %arg4[%c0_12, %c0_13, %c0_14] : memref<1x8x8xf32, #tpu.memory_space<vmem>>, vector<1x8x8xf32>
    tpu.vector_store %arg4[%c0_12, %c0_13, %c0_14], %16 {strides = array<i32>} : memref<1x8x8xf32, #tpu.memory_space<vmem>>, vector<1x8x8xf32>,
    return
  }
  func.func @transform_0(%arg0: i32, %arg1: i32) -> (i32, i32, i32) {
    %c1_i32 = arith.constant 1 : i32
    %0 = arith.muli %arg0, %c1_i32 : i32
    %1 = arith.addi %0, %arg1 : i32
    %c0_i32 = arith.constant 0 : i32
    %c0_i32_0 = arith.constant 0 : i32
    %c0_i32_1 = arith.constant 0 : i32
    return %1, %c0_i32, %c0_i32_0 : i32, i32, i32
  }
  func.func @transform_1(%arg0: i32, %arg1: i32) -> (i32, i32, i32) {
    %c1_i32 = arith.constant 1 : i32
    %0 = arith.muli %arg0, %c1_i32 : i32
    %1 = arith.addi %0, %arg1 : i32
    %c0_i32 = arith.constant 0 : i32
    %c0_i32_0 = arith.constant 0 : i32
    %c0_i32_1 = arith.constant 0 : i32
    return %1, %c0_i32, %c0_i32_0 : i32, i32, i32
  }
  func.func @transform_2(%arg0: i32, %arg1: i32) -> (i32, i32, i32) {
    %c0_i32 = arith.constant 0 : i32
    %c0_i32_0 = arith.constant 0 : i32
    %c0_i32_1 = arith.constant 0 : i32
    return %arg0, %c0_i32, %c0_i32_0 : i32, i32, i32
  }
}

</mosaic_0001>

<llo_original>
// kernel: gradcam_mask.3
$region0: #{gradcam_mask.3}
  #allocation0 [shape = 'u32[]', space=smem, size = 0x4, offset = 0x4, fixed_abs, tag = 'smem constant byte address 0x4 - core index']
  #allocation1 [shape = 'u32[72,128]{1,0:T(1,128)}', space=vmem, size = 0x9000, scoped, tag = 'internal scratch']
  %s0 = inlined_call_operand.vmem [shape: f32[1,8,8], index: 0, kind: input, shape index: {}]
  %s1 = inlined_call_operand.hbm [shape: f32[32,8], index: 1, kind: input, shape index: {}]
  %s2 = inlined_call_operand.hbm [shape: f32[8,32], index: 2, kind: input, shape index: {}]
  %s3 = inlined_call_operand.hbm [shape: f32[32,32], index: 3, kind: output, shape index: {}]
  %s4 = sld [smem:[#allocation0]]
  $region30: #{gradcam_mask.3} parent=0
    _
  %s6 = ssub.s32 1, %s4
  %s7 = scalar_select 0, %s6, %s4
  $region1: #{gradcam_mask.3} parent=0
    #allocation2 [shape = 'u8[16384]{0}', space=vmem, size = 0x4000, scoped, tag = 'input window, operand 1, single buffered']
    #allocation3 [shape = 's32[1]{0}', space=sflag, size = 0x4, scoped, tag = 'scoped memory for gradcam_mask.3']
    #allocation4 [shape = 's32[1]{0}', space=sflag, size = 0x4, scoped, tag = 'scoped memory for gradcam_mask.3']
    #allocation5 [shape = 'u8[4096]{0}', space=vmem, size = 0x1000, scoped, tag = 'input window, operand 2, single buffered']
    #allocation6 [shape = 's32[1]{0}', space=sflag, size = 0x4, scoped, tag = 'scoped memory for gradcam_mask.3']
    #allocation7 [shape = 'u8[16384]{0}', space=vmem, size = 0x4000, scoped, tag = 'output window, operand 0, single buffered']
    %8 = vsyncpa [#allocation3], 0
    %9 = vsyncpa [#allocation6], 0
    %10 = vsyncpa [#allocation4], 0
    // Predicated region
    $region2: #{gradcam_mask.3} parent=1 // pred_check
      _
    $region3: #{gradcam_mask.3} parent=1 // pred_check_branch
      %12 = sbr.rel (0) target = $region5
    $region4: #{gradcam_mask.3} parent=1 // pred_region
      _
    $region5: #{gradcam_mask.3} parent=1 // pred_fallthru
      _
    // Predicated region
    $region6: #{gradcam_mask.3} parent=1 // pred_check
      _
    $region7: #{gradcam_mask.3} parent=1 // pred_check_branch
      %14 = sbr.rel (0) target = $region9
    $region8: #{gradcam_mask.3} parent=1 // pred_region
      %16 = vsyncadd [#allocation3], 0
      %s17 = sshll.u32 %s1, 4
      %s18 = int_to_ptr.hbm [resolvable:$true] %s17
      %s19 = sshll.u32 [#allocation2], 4
      %s20 = int_to_ptr.vmem [resolvable:$true] %s19
      %25 = dma.hbm_to_vmem [thread:$0]  %s18, 512, %s20, [#allocation3], 128, 128, 8
    $region9: #{gradcam_mask.3} parent=1 // pred_fallthru
      _
    // Predicated region
    $region10: #{gradcam_mask.3} parent=1 // pred_check
      _
    $region11: #{gradcam_mask.3} parent=1 // pred_check_branch
      %27 = sbr.rel (0) target = $region13
    $region12: #{gradcam_mask.3} parent=1 // pred_region
      %29 = vsyncadd [#allocation6], 0
      %s31 = sshll.u32 %s2, 4
      %s32 = int_to_ptr.hbm [resolvable:$true] %s31
      %s33 = sshll.u32 [#allocation5], 4
      %s34 = int_to_ptr.vmem [resolvable:$true] %s33
      %36 = dma.hbm_to_vmem [thread:$0]  %s32, 128, %s34, [#allocation6]
    $region13: #{gradcam_mask.3} parent=1 // pred_fallthru
      _
    // Predicated region
    $region14: #{gradcam_mask.3} parent=1 // pred_check
      _
    $region15: #{gradcam_mask.3} parent=1 // pred_check_branch
      %38 = sbr.rel (0) target = $region17
    $region16: #{gradcam_mask.3} parent=1 // pred_region
      %40 = dma.done [#allocation3], 512
    $region17: #{gradcam_mask.3} parent=1 // pred_fallthru
      _
    // Predicated region
    $region18: #{gradcam_mask.3} parent=1 // pred_check
      _
    $region19: #{gradcam_mask.3} parent=1 // pred_check_branch
      %42 = sbr.rel (0) target = $region21
    $region20: #{gradcam_mask.3} parent=1 // pred_region
      %44 = dma.done [#allocation6], 128
    $region21: #{gradcam_mask.3} parent=1 // pred_fallthru
      _
    %v45 = vld [vmem:[%s0] sm:$0xff]
    %v46 = vadd.f32 %v45, 0.0
    %vm47 = vcmask 64512
    %v48 = vsel %vm47, %v46, -inf
    %49 = vmax.xlane.f32.xlu0 %v48
    %v50 = vpop.xlane.xlu0 %49
    %v51 = vrot.slane %v50, 4
    %v52 = vmax.f32 %v50, %v51
    %v53 = vrot.slane %v52, 2
    %v54 = vmax.f32 %v52, %v53
    %v55 = vrot.slane %v54, 1
    %v56 = vmax.f32 %v54, %v55
    %s57 = vtos %v56
    %v58 = vmax.f32 %v46, 0.0
    %v59 = vld [vmem:[#allocation2] sm:$0xff]
    %v60 = vld [vmem:[#allocation2 + $0x8] sm:$0xff]
    %v61 = vld [vmem:[#allocation2 + $0x10] sm:$0xff]
    %v62 = vld [vmem:[#allocation2 + $0x18] sm:$0xff]
    %v64 = vsel %vm47, %v59, 0
    %v67 = vsel %vm47, %v60, 0
    %v70 = vsel %vm47, %v61, 0
    %v73 = vsel %vm47, %v62, 0
    %75 = vmatpush.msra.mxu0 0.0
    %76 = vmatpush.msra.mxu0 0.0
    %77 = vmatpush.msra.mxu0 0.0
    %78 = vmatpush.msra.mxu0 0.0
    %79 = vmatpush.msra.mxu0 0.0
    %80 = vmatpush.msra.mxu0 0.0
    %81 = vmatpush.msra.mxu0 0.0
    %82 = vmatpush.msra.mxu0 0.0
    %83 = vmatpush.msra.mxu0 0.0
    %84 = vmatpush.msra.mxu0 0.0
    %85 = vmatpush.msra.mxu0 0.0
    %86 = vmatpush.msra.mxu0 0.0
    %87 = vmatpush.msra.mxu0 0.0
    %88 = vmatpush.msra.mxu0 0.0
    %89 = vmatpush.msra.mxu0 0.0
    %90 = vmatpush.msra.mxu0 %v58
    %91 = vmatmul.f32.gmra.mxu0 %v64
    %v92 = vpop.f32.mrf.mxu0
    %v93 = vadd.f32 0.0, %v92
    %94 = vmatmul.f32.gmra.mxu0 %v67
    %v95 = vpop.f32.mrf.mxu0
    %v96 = vadd.f32 0.0, %v95
    %97 = vmatmul.f32.gmra.mxu0 %v70
    %v98 = vpop.f32.mrf.mxu0
    %v99 = vadd.f32 0.0, %v98
    %100 = vmatmul.f32.gmra.mxu0 %v73
    %v101 = vpop.f32.mrf.mxu0
    %v102 = vadd.f32 0.0, %v101
    %103 = vdwg.mxu0
    %v104 = vld [vmem:[#allocation5] sm:$0xff]
    %v106 = vsel %vm47, %v93, 0
    %v109 = vsel %vm47, %v96, 0
    %v112 = vsel %vm47, %v99, 0
    %v115 = vsel %vm47, %v102, 0
    %117 = vmatpush.msra.mxu0 0.0
    %118 = vmatpush.msra.mxu0 0.0
    %119 = vmatpush.msra.mxu0 0.0
    %120 = vmatpush.msra.mxu0 0.0
    %121 = vmatpush.msra.mxu0 0.0
    %122 = vmatpush.msra.mxu0 0.0
    %123 = vmatpush.msra.mxu0 0.0
    %124 = vmatpush.msra.mxu0 0.0
    %125 = vmatpush.msra.mxu0 0.0
    %126 = vmatpush.msra.mxu0 0.0
    %127 = vmatpush.msra.mxu0 0.0
    %128 = vmatpush.msra.mxu0 0.0
    %129 = vmatpush.msra.mxu0 0.0
    %130 = vmatpush.msra.mxu0 0.0
    %131 = vmatpush.msra.mxu0 0.0
    %132 = vmatpush.msra.mxu0 %v104
    %133 = vmatmul.f32.gmra.mxu0 %v106
    %v134 = vpop.f32.mrf.mxu0
    %v135 = vadd.f32 0.0, %v134
    %136 = vmatmul.f32.gmra.mxu0 %v109
    %v137 = vpop.f32.mrf.mxu0
    %v138 = vadd.f32 0.0, %v137
    %139 = vmatmul.f32.gmra.mxu0 %v112
    %v140 = vpop.f32.mrf.mxu0
    %v141 = vadd.f32 0.0, %v140
    %142 = vmatmul.f32.gmra.mxu0 %v115
    %v143 = vpop.f32.mrf.mxu0
    %v144 = vadd.f32 0.0, %v143
    %145 = vdwg.mxu0
    %v146 = vstv %s57
    %v147 = vrcp.pop %v146
    %v148 = vmul.f32 %v146, %v147
    %v149 = vsub.f32 1.0, %v148
    %v150 = vmul.f32 %v147, %v149
    %v151 = vadd.f32 %v147, %v150
    %vm152 = vweird.f32 %v146
    %vm153 = vweird.f32 %v147
    %vm154 = vmor %vm152, %vm153
    %v155 = vsel %vm154, %v147, %v151
    %v156 = vand.u32 2147483647, %v146
    %vm157 = vcmp.eq.f32.partialorder %v156, 8.507059e+37
    %v158 = vand.u32 %v146, 2147483648
    %v159 = vor.u32 1.1754944e-38, %v158
    %v160 = vsel %vm157, %v159, %v155
    %v161 = vmul.f32 %v135, %v160
    %v162 = vmul.f32 %v138, %v160
    %v163 = vmul.f32 %v141, %v160
    %v164 = vmul.f32 %v144, %v160
    %vm165 = vcmask 261120
    %166 = vst.msk [vmem:[#allocation7] sm:$0xff] %vm165, %v161
    %167 = vst.msk [vmem:[#allocation7 + $0x8] sm:$0xff] %vm165, %v162
    %168 = vst.msk [vmem:[#allocation7 + $0x10] sm:$0xff] %vm165, %v163
    %169 = vst.msk [vmem:[#allocation7 + $0x18] sm:$0xff] %vm165, %v164
    // Predicated region
    $region22: #{gradcam_mask.3} parent=1 // pred_check
      _
    $region23: #{gradcam_mask.3} parent=1 // pred_check_branch
      %171 = sbr.rel (0) target = $region25
    $region24: #{gradcam_mask.3} parent=1 // pred_region
      %173 = vsyncadd [#allocation4], 0
      %s174 = sshll.u32 [#allocation7], 4
      %s175 = int_to_ptr.vmem [resolvable:$true] %s174
      %s176 = sshll.u32 %s3, 4
      %s177 = int_to_ptr.hbm [resolvable:$true] %s176
      %182 = dma.vmem_to_hbm [thread:$0]  %s175, 512, %s177, [#allocation4], 128, 128, 8
    $region25: #{gradcam_mask.3} parent=1 // pred_fallthru
      _
    // Predicated region
    $region26: #{gradcam_mask.3} parent=1 // pred_check
      _
    $region27: #{gradcam_mask.3} parent=1 // pred_check_branch
      %184 = sbr.rel (0) target = $region29
    $region28: #{gradcam_mask.3} parent=1 // pred_region
      %186 = dma.done [#allocation4], 512
    $region29: #{gradcam_mask.3} parent=1 // pred_fallthru
      _
    %187 = vsyncpa [#allocation3], 1
    %188 = vsyncpa [#allocation6], 1
    %189 = vsyncpa [#allocation4], 1

// kernel: gradcam_mask.2
$region0: #{gradcam_mask.2}
  #allocation0 [shape = 'u32[]', space=smem, size = 0x4, offset = 0x4, fixed_abs, tag = 'smem constant byte address 0x4 - core index']
  #allocation1 [shape = 'u32[72,128]{1,0:T(1,128)}', space=vmem, size = 0x9000, scoped, tag = 'internal scratch']
  %s0 = inlined_call_operand.hbm [shape: f32[4,8,8], index: 0, kind: input, shape index: {}]
  %s1 = inlined_call_operand.hbm [shape: f32[4,8,8], index: 1, kind: input, shape index: {}]
  %s2 = inlined_call_operand.vmem [shape: f32[1,8,8], index: 2, kind: output, shape index: {}]
  %s3 = sld [smem:[#allocation0]]
  $region30: #{gradcam_mask.2} parent=0
    _
  %s5 = ssub.s32 1, %s3
  %s6 = scalar_select 0, %s5, %s3
  $region1: #{gradcam_mask.2} parent=0
    #allocation2 [shape = 'u8[16384]{0}', space=vmem, size = 0x4000, scoped, tag = 'input window, operand 0, single buffered']
    #allocation3 [shape = 's32[1]{0}', space=sflag, size = 0x4, scoped, tag = 'scoped memory for gradcam_mask.2']
    #allocation4 [shape = 'u8[16384]{0}', space=vmem, size = 0x4000, scoped, tag = 'input window, operand 1, single buffered']
    #allocation5 [shape = 's32[1]{0}', space=sflag, size = 0x4, scoped, tag = 'scoped memory for gradcam_mask.2']
    %7 = vsyncpa [#allocation3], 0
    %8 = vsyncpa [#allocation5], 0
    // Predicated region
    $region2: #{gradcam_mask.2} parent=1 // pred_check
      _
    $region3: #{gradcam_mask.2} parent=1 // pred_check_branch
      %10 = sbr.rel (0) target = $region5
    $region4: #{gradcam_mask.2} parent=1 // pred_region
      %s11 = sadd.s32 0, 0
      %s12 = smul.u32 4, %s11
      %14 = vsyncadd [#allocation3], 0
      %s15 = smul.addr %s12, 8
      %s16 = scalar_lea.hbm %s0, %s15
      %s17 = sshll.u32 %s16, 4
      %s18 = int_to_ptr.hbm [resolvable:$true] %s17
      %s19 = sshll.u32 [#allocation2], 4
      %s20 = int_to_ptr.vmem [resolvable:$true] %s19
      %25 = dma.hbm_to_vmem [thread:$0]  %s18, 512, %s20, [#allocation3], 128, 128, 8
    $region5: #{gradcam_mask.2} parent=1 // pred_fallthru
      _
    // Predicated region
    $region6: #{gradcam_mask.2} parent=1 // pred_check
      _
    $region7: #{gradcam_mask.2} parent=1 // pred_check_branch
      %27 = sbr.rel (0) target = $region9
    $region8: #{gradcam_mask.2} parent=1 // pred_region
      %s28 = sadd.s32 0, 0
      %s29 = smul.u32 4, %s28
      %31 = vsyncadd [#allocation5], 0
      %s32 = smul.addr %s29, 8
      %s33 = scalar_lea.hbm %s1, %s32
      %s34 = sshll.u32 %s33, 4
      %s35 = int_to_ptr.hbm [resolvable:$true] %s34
      %s36 = sshll.u32 [#allocation4], 4
      %s37 = int_to_ptr.vmem [resolvable:$true] %s36
      %42 = dma.hbm_to_vmem [thread:$0]  %s35, 512, %s37, [#allocation5], 128, 128, 8
    $region9: #{gradcam_mask.2} parent=1 // pred_fallthru
      _
    // Predicated region
    $region10: #{gradcam_mask.2} parent=1 // pred_check
      _
    $region11: #{gradcam_mask.2} parent=1 // pred_check_branch
      %44 = sbr.rel (0) target = $region13
    $region12: #{gradcam_mask.2} parent=1 // pred_region
      %46 = dma.done [#allocation3], 512
    $region13: #{gradcam_mask.2} parent=1 // pred_fallthru
      _
    // Predicated region
    $region14: #{gradcam_mask.2} parent=1 // pred_check
      _
    $region15: #{gradcam_mask.2} parent=1 // pred_check_branch
      %48 = sbr.rel (0) target = $region17
    $region16: #{gradcam_mask.2} parent=1 // pred_region
      %50 = dma.done [#allocation5], 512
    $region17: #{gradcam_mask.2} parent=1 // pred_fallthru
      _
    %s51 = sadd.s32 0, 0
    %s52 = smul.u32 4, %s51
    %s53 = sadd.s32 0, 0
    %s54 = smul.u32 4, %s53
    %p55 = scmp.eq.s32.totalorder 0, 0
    // Predicated region
    $region18: #{gradcam_mask.2} parent=1 // pred_check
      %p56 = pneg %p55
    $region19: #{gradcam_mask.2} parent=1 // pred_check_branch
      %58 = sbr.rel (%p56) target = $region21
    $region20: #{gradcam_mask.2} parent=1 // pred_region
      %vm59 = vcmask 64512
      %60 = vst.msk [vmem:[%s2] sm:$0xff] %vm59, 0.0
    $region21: #{gradcam_mask.2} parent=1 // pred_fallthru
      _
    %v61 = vld [vmem:[#allocation2] sm:$0xff]
    %v62 = vld [vmem:[#allocation2 + $0x8] sm:$0xff]
    %v63 = vld [vmem:[#allocation2 + $0x10] sm:$0xff]
    %v64 = vld [vmem:[#allocation2 + $0x18] sm:$0xff]
    %v65 = vld [vmem:[#allocation4] sm:$0xff]
    %v66 = vld [vmem:[#allocation4 + $0x8] sm:$0xff]
    %v67 = vld [vmem:[#allocation4 + $0x10] sm:$0xff]
    %v68 = vld [vmem:[#allocation4 + $0x18] sm:$0xff]
    %vm69 = vcmask 64512
    %v70 = vsel %vm69, %v65, 0.0
    %v71 = vrot.slane %v70, 4
    %v72 = vadd.f32 %v70, %v71
    %v73 = vrot.slane %v72, 2
    %v74 = vadd.f32 %v72, %v73
    %v75 = vrot.slane %v74, 1
    %v76 = vadd.f32 %v74, %v75
    %v77 = vsel %vm69, %v66, 0.0
    %v78 = vrot.slane %v77, 4
    %v79 = vadd.f32 %v77, %v78
    %v80 = vrot.slane %v79, 2
    %v81 = vadd.f32 %v79, %v80
    %v82 = vrot.slane %v81, 1
    %v83 = vadd.f32 %v81, %v82
    %v84 = vsel %vm69, %v67, 0.0
    %v85 = vrot.slane %v84, 4
    %v86 = vadd.f32 %v84, %v85
    %v87 = vrot.slane %v86, 2
    %v88 = vadd.f32 %v86, %v87
    %v89 = vrot.slane %v88, 1
    %v90 = vadd.f32 %v88, %v89
    %v91 = vsel %vm69, %v68, 0.0
    %v92 = vrot.slane %v91, 4
    %v93 = vadd.f32 %v91, %v92
    %v94 = vrot.slane %v93, 2
    %v95 = vadd.f32 %v93, %v94
    %v96 = vrot.slane %v95, 1
    %v97 = vadd.f32 %v95, %v96
    %v98 = vsel %vm69, %v76, 0.0
    %99 = vadd.xlane.f32.xlu0 %v98
    %v100 = vpop.xlane.xlu0 %99
    %v101 = vsel %vm69, %v83, 0.0
    %102 = vadd.xlane.f32.xlu0 %v101
    %v103 = vpop.xlane.xlu0 %102
    %v104 = vsel %vm69, %v90, 0.0
    %105 = vadd.xlane.f32.xlu0 %v104
    %v106 = vpop.xlane.xlu0 %105
    %v107 = vsel %vm69, %v97, 0.0
    %108 = vadd.xlane.f32.xlu0 %v107
    %v109 = vpop.xlane.xlu0 %108
    %v110 = vmul.f32 %v100, 0.015625
    %v111 = vmul.f32 %v103, 0.015625
    %v112 = vmul.f32 %v106, 0.015625
    %v113 = vmul.f32 %v109, 0.015625
    %v114 = vld [vmem:[%s2] sm:$0xff]
    %v115 = vmul.f32 %v110, %v61
    %v116 = vmul.f32 %v111, %v62
    %v117 = vmul.f32 %v112, %v63
    %v118 = vmul.f32 %v113, %v64
    %v119 = vsel %vm69, %v115, 0.0
    %v120 = vsel %vm69, %v116, 0.0
    %v121 = vadd.f32 %v119, %v120
    %v122 = vsel %vm69, %v117, 0.0
    %v123 = vadd.f32 %v121, %v122
    %v124 = vsel %vm69, %v118, 0.0
    %v125 = vadd.f32 %v123, %v124
    %v126 = vadd.f32 %v114, %v125
    %127 = vst.msk [vmem:[%s2] sm:$0xff] %vm69, %v126
    // Predicated region
    $region22: #{gradcam_mask.2} parent=1 // pred_check
      _
    $region23: #{gradcam_mask.2} parent=1 // pred_check_branch
      %129 = sbr.rel (0) target = $region25
    $region24: #{gradcam_mask.2} parent=1 // pred_region
      _
    $region25: #{gradcam_mask.2} parent=1 // pred_fallthru
      _
    // Predicated region
    $region26: #{gradcam_mask.2} parent=1 // pred_check
      _
    $region27: #{gradcam_mask.2} parent=1 // pred_check_branch
      %131 = sbr.rel (0) target = $region29
    $region28: #{gradcam_mask.2} parent=1 // pred_region
      _
    $region29: #{gradcam_mask.2} parent=1 // pred_fallthru
      _
    %132 = vsyncpa [#allocation3], 1
    %133 = vsyncpa [#allocation5], 1

</llo_original>
